<compile_context>
chip_gen: v7x
topology: tpu7x:2x2x1
jax: 0.10.0
libtpu: 0.0.40
codegen_flags: <defaults>
</compile_context>

<pallas_src>
import functools
import math

import jax
import jax.numpy as jnp
from jax import lax
from jax.experimental import pallas as pl
from jax.experimental.pallas import tpu as pltpu

_LOG_2PI = math.log(2.0 * math.pi)
_LANES = 128


def _round_up(x: int, m: int) -> int:
    return ((x + m - 1) // m) * m


def _chip_config():
    """(max_block_rows, preferred_splits, approx_recip) for the local chip."""
    kind = ""
    try:
        kind = jax.local_devices()[0].device_kind.lower()
    except Exception:
        pass
    if "v7" in kind:        # 2 TCs/chip, ~3.2 TB/s HBM, 64 MiB VMEM per TC
        return 8192, 2, True
    if "v6" in kind:        # single TC, ~1.4 TB/s, 128 MiB VMEM
        return 4096, 1, False
    if "v5" in kind:        # single TC, ~0.8 TB/s, 128 MiB VMEM (16 MiB scoped default)
        return 2048, 1, False
    return 2048, 1, False   # unknown chip: conservative, always-safe


def _nll_gaussian_kernel(mean_ref, var_ref, tgt_ref, out_ref, *,
                         block_rows, acc_rows, tiles_per_split, total_rows,
                         needs_edge, approx_recip):
    c = pl.program_id(0)   # split axis ("parallel"; sharded across TCs on v7x)
    i = pl.program_id(1)   # reduction axis ("arbitrary")

    @pl.when(i == 0)
    def _():
        out_ref[...] = jnp.zeros_like(out_ref)

    nslabs = block_rows // acc_rows
    # Global first row of this block.  (int32 is ample: row count = n/128.)
    start_row = (c * tiles_per_split + i) * block_rows

    def slab_loss(s):
        sl = pl.ds(pl.multiple_of(s * acc_rows, acc_rows), acc_rows)
        mean = mean_ref[sl, :].astype(jnp.float32)
        var = var_ref[sl, :].astype(jnp.float32)
        tgt = tgt_ref[sl, :].astype(jnp.float32)
        var_stable = jnp.maximum(var, 1e-6)          # torch.clamp(min=1e-6)
        diff = tgt - mean
        # The 0.5 factor and +log(2*pi) are constants -> applied once in the
        # wrapper epilogue.  Reciprocal goes to the EUP instead of a VPU divide.
        return jnp.log(var_stable) + diff * diff * pl.reciprocal(
            var_stable, approx=approx_recip)

    def accumulate(masked):
        def body(s, acc):
            val = slab_loss(s)
            if masked:
                # Rows at/after `total_rows` are garbage from the implicit
                # partial last block (or a clamped overhang step): zero them.
                # NaN/Inf garbage is discarded by the select, never summed.
                row = (start_row + s * acc_rows
                       + lax.broadcasted_iota(jnp.int32, (acc_rows, _LANES), 0))
                val = jnp.where(row < total_rows, val, 0.0)
            return acc + val
        partial = lax.fori_loop(0, nslabs, body,
                                jnp.zeros((acc_rows, _LANES), jnp.float32))
        out_ref[...] += partial

    if needs_edge:   # static: compiled only if a partial row-block can occur
        is_edge = start_row + block_rows > total_rows

        @pl.when(jnp.logical_not(is_edge))
        def _():
            accumulate(masked=False)

        @pl.when(is_edge)
        def _():
            accumulate(masked=True)
    else:
        accumulate(masked=False)


def nll_loss_gaussian(mean_pred: jax.Array, var_pred: jax.Array,
                      target: jax.Array) -> jax.Array:
    assert mean_pred.shape == var_pred.shape == target.shape
    n = mean_pred.size
    assert n > 0

    max_rows, pref_splits, approx_recip = _chip_config()

    lane_pad = (-n) % _LANES
    rows = (n + lane_pad) // _LANES

    def _prep(x, pad_value):
        x = jnp.ravel(x)
        if not jnp.issubdtype(x.dtype, jnp.floating):
            x = x.astype(jnp.float32)
        if lane_pad:
            # < 128-element tail pad only (never a full block-level re-pad).
            # Pad values are chosen so padded lanes contribute exactly 0 loss:
            #   log(max(1, 1e-6)) + (0 - 0)^2 / 1 == 0
            x = jnp.pad(x, (0, lane_pad), constant_values=pad_value)
        return x.reshape(rows, _LANES)

    mean2d = _prep(mean_pred, 0.0)
    var2d = _prep(var_pred, 1.0)
    tgt2d = _prep(target, 0.0)

    # Row-block tiling.  A partial last block is handled by Pallas' implicit
    # partial-block DMA + the in-kernel edge mask, so rows are never padded.
    block_rows = max(8, min(max_rows, _round_up(-(-rows // pref_splits), 8)))
    row_blocks = -(-rows // block_rows)
    splits = min(pref_splits, row_blocks)
    tiles_per_split = -(-row_blocks // splits)
    acc_rows = 32 if block_rows % 32 == 0 else 8
    needs_edge = (rows % block_rows != 0) or (splits * tiles_per_split != row_blocks)

    if splits * tiles_per_split > row_blocks:
        # Overhang steps re-read the last real block (their contribution is
        # masked to zero in-kernel); keep the DMA window in bounds.
        def in_map(c, i):
            return (jnp.minimum(c * tiles_per_split + i, row_blocks - 1), 0)
    else:
        def in_map(c, i):
            return (c * tiles_per_split + i, 0)

    in_spec = pl.BlockSpec((block_rows, _LANES), in_map)

    itemsize_sum = sum(x.dtype.itemsize for x in (mean2d, var2d, tgt2d))
    vmem_needed = 2 * block_rows * _LANES * itemsize_sum + 4 * acc_rows * _LANES * 4
    vmem_limit = int(max(vmem_needed + (4 << 20), 16 << 20))

    partial = pl.pallas_call(
        functools.partial(_nll_gaussian_kernel,
                          block_rows=block_rows,
                          acc_rows=acc_rows,
                          tiles_per_split=tiles_per_split,
                          total_rows=rows,
                          needs_edge=needs_edge,
                          approx_recip=approx_recip),
        out_shape=jax.ShapeDtypeStruct((splits * acc_rows, _LANES), jnp.float32),
        grid_spec=pltpu.PrefetchScalarGridSpec(
            num_scalar_prefetch=0,
            grid=(splits, tiles_per_split),
            in_specs=[in_spec, in_spec, in_spec],
            out_specs=pl.BlockSpec((acc_rows, _LANES), lambda c, i: (c, 0)),
        ),
        compiler_params=pltpu.CompilerParams(
            dimension_semantics=("parallel", "arbitrary"),
            vmem_limit_bytes=vmem_limit),
    )(mean2d, var2d, tgt2d)

    # Epilogue: single cross-lane reduce + constants, done once outside.
    total = jnp.sum(partial)
    return 0.5 * (total / n + _LOG_2PI)


def _reference(mean_pred, var_pred, target):
    var_stable = jnp.maximum(var_pred, 1e-6)
    log_var = jnp.log(var_stable)
    sq_error = (target - mean_pred) ** 2
    loss = 0.5 * (log_var + sq_error / var_stable + _LOG_2PI)
    return jnp.mean(loss)


if __name__ == "__main__":
    key = jax.random.PRNGKey(0)
    k1, k2, k3 = jax.random.split(key, 3)

    _, _, _approx = _chip_config()
    tol = 5e-3 if _approx else 1e-5   # looser only when approx reciprocal is on (v7x)

    # Small NCHW prediction-head shapes (lane-aligned path: n % 128 == 0,
    # zero host-side copies).
    shape = (2, 4, 16, 16)
    mean_pred = jax.random.normal(k1, shape, dtype=jnp.float32)
    var_pred = jnp.abs(jax.random.normal(k2, shape, dtype=jnp.float32)) * 0.5
    target = jax.random.normal(k3, shape, dtype=jnp.float32)

    loss = jax.block_until_ready(nll_loss_gaussian(mean_pred, var_pred, target))
    ref = _reference(mean_pred, var_pred, target)
    assert jnp.allclose(loss, ref, rtol=tol, atol=tol), (loss, ref)

    # Ragged case: n not a multiple of 128 -> tiny (<128 elem) tail pad plus the
    # implicit-partial-block / in-kernel row-mask path.
    shape2 = (3, 5, 7, 11)
    m2 = jax.random.normal(k1, shape2, dtype=jnp.float32)
    v2 = jnp.abs(jax.random.normal(k2, shape2, dtype=jnp.float32)) * 0.5
    t2 = jax.random.normal(k3, shape2, dtype=jnp.float32)
    loss2 = jax.block_until_ready(nll_loss_gaussian(m2, v2, t2))
    ref2 = _reference(m2, v2, t2)
    assert jnp.allclose(loss2, ref2, rtol=tol, atol=tol), (loss2, ref2)

    # bf16 path: native-dtype streaming + in-kernel upcast.
    mb = mean_pred.astype(jnp.bfloat16)
    vb = var_pred.astype(jnp.bfloat16)
    tb = target.astype(jnp.bfloat16)
    loss3 = jax.block_until_ready(nll_loss_gaussian(mb, vb, tb))
    ref3 = _reference(mb.astype(jnp.float32), vb.astype(jnp.float32),
                      tb.astype(jnp.float32))
    assert jnp.allclose(loss3, ref3, rtol=max(tol, 1e-4), atol=max(tol, 1e-4)), (loss3, ref3)

    print("KERNEL_OK")
</pallas_src>

<mosaic_0001>
module attributes {stable_mosaic.version = 11 : i64} {
  func.func @_nll_gaussian_kernel(%arg0: i32, %arg1: i32, %arg2: memref<16x128xf32, #tpu.memory_space<vmem>>, %arg3: memref<16x128xf32, #tpu.memory_space<vmem>>, %arg4: memref<16x128xf32, #tpu.memory_space<vmem>>, %arg5: memref<8x128xf32, #tpu.memory_space<vmem>>) attributes {dimension_semantics = [#tpu.dimension_semantics<parallel>, #tpu.dimension_semantics<arbitrary>], iteration_bounds = array<i64: 1, 1>, scalar_prefetch = 0 : i64, scratch_operands = 0 : i64, tpu.core_type = #tpu.core_type<tc>, window_params = [{transform_indices = @transform_0, window_bounds = array<i64: 16, 128>}, {transform_indices = @transform_1, window_bounds = array<i64: 16, 128>}, {transform_indices = @transform_2, window_bounds = array<i64: 16, 128>}, {transform_indices = @transform_3, window_bounds = array<i64: 8, 128>}]} {
    %c0_i32 = arith.constant 0 : i32
    %0 = arith.cmpi eq, %arg1, %c0_i32 : i32
    %1 = arith.extui %0 : i1 to i32
    %c0_i32_0 = arith.constant 0 : i32
    %2 = arith.cmpi ne, %1, %c0_i32_0 : i32
    scf.if %2 {
      %cst_6 = arith.constant 0.000000e+00 : f32
      %9 = vector.broadcast %cst_6 : f32 to vector<8x128xf32>
      %c0_7 = arith.constant 0 : index
      %c0_8 = arith.constant 0 : index
      %10 = vector.load %arg5[%c0_7, %c0_8] : memref<8x128xf32, #tpu.memory_space<vmem>>, vector<8x128xf32>
      tpu.vector_store %arg5[%c0_7, %c0_8], %9 {strides = array<i32>} : memref<8x128xf32, #tpu.memory_space<vmem>>, vector<8x128xf32>,
    } else {
    }
    %cst = arith.constant 0.000000e+00 : f32
    %3 = vector.broadcast %cst : f32 to vector<8x128xf32>
    %c0_i32_1 = arith.constant 0 : i32
    %c2_i32 = arith.constant 2 : i32
    %4 = arith.addi %c0_i32_1, %c2_i32 : i32
    %c1_i32 = arith.constant 1 : i32
    %5 = scf.for %arg6 = %c0_i32_1 to %4 step %c1_i32 iter_args(%arg7 = %3) -> (vector<8x128xf32>)  : i32 {
      %c8_i32 = arith.constant 8 : i32
      %9 = arith.muli %arg6, %c8_i32 : i32
      %10 = tpu.assume_multiple %9, 8 : i32
      %11 = arith.index_cast %10 : i32 to index
      %c0_6 = arith.constant 0 : index
      %12 = vector.load %arg2[%11, %c0_6] : memref<16x128xf32, #tpu.memory_space<vmem>>, vector<8x128xf32>
      %13 = arith.index_cast %10 : i32 to index
      %c0_7 = arith.constant 0 : index
      %14 = vector.load %arg3[%13, %c0_7] : memref<16x128xf32, #tpu.memory_space<vmem>>, vector<8x128xf32>
      %15 = arith.index_cast %10 : i32 to index
      %c0_8 = arith.constant 0 : index
      %16 = vector.load %arg4[%15, %c0_8] : memref<16x128xf32, #tpu.memory_space<vmem>>, vector<8x128xf32>
      %cst_9 = arith.constant 9.99999997E-7 : f32
      %17 = vector.broadcast %cst_9 : f32 to vector<8x128xf32>
      %18 = arith.maximumf %14, %17 : vector<8x128xf32>
      %19 = arith.subf %16, %12 : vector<8x128xf32>
      %20 = math.log %18 : vector<8x128xf32>
      %21 = arith.mulf %19, %19 : vector<8x128xf32>
      %22 = tpu.reciprocal %18 : vector<8x128xf32> -> vector<8x128xf32>
      %23 = arith.mulf %21, %22 : vector<8x128xf32>
      %24 = arith.addf %20, %23 : vector<8x128xf32>
      %25 = arith.addf %arg7, %24 : vector<8x128xf32>
      scf.yield %25 : vector<8x128xf32>
    }
    %c2_i32_2 = arith.constant 2 : i32
    %c0 = arith.constant 0 : index
    %c0_3 = arith.constant 0 : index
    %6 = vector.load %arg5[%c0, %c0_3] : memref<8x128xf32, #tpu.memory_space<vmem>>, vector<8x128xf32>
    %7 = arith.addf %6, %5 : vector<8x128xf32>
    %c0_4 = arith.constant 0 : index
    %c0_5 = arith.constant 0 : index
    %8 = vector.load %arg5[%c0_4, %c0_5] : memref<8x128xf32, #tpu.memory_space<vmem>>, vector<8x128xf32>
    tpu.vector_store %arg5[%c0_4, %c0_5], %7 {strides = array<i32>} : memref<8x128xf32, #tpu.memory_space<vmem>>, vector<8x128xf32>,
    return
  }
  func.func @transform_0(%arg0: i32, %arg1: i32) -> (i32, i32) {
    %c1_i32 = arith.constant 1 : i32
    %0 = arith.muli %arg0, %c1_i32 : i32
    %1 = arith.addi %0, %arg1 : i32
    %c0_i32 = arith.constant 0 : i32
    %c0_i32_0 = arith.constant 0 : i32
    return %1, %c0_i32 : i32, i32
  }
  func.func @transform_1(%arg0: i32, %arg1: i32) -> (i32, i32) {
    %c1_i32 = arith.constant 1 : i32
    %0 = arith.muli %arg0, %c1_i32 : i32
    %1 = arith.addi %0, %arg1 : i32
    %c0_i32 = arith.constant 0 : i32
    %c0_i32_0 = arith.constant 0 : i32
    return %1, %c0_i32 : i32, i32
  }
  func.func @transform_2(%arg0: i32, %arg1: i32) -> (i32, i32) {
    %c1_i32 = arith.constant 1 : i32
    %0 = arith.muli %arg0, %c1_i32 : i32
    %1 = arith.addi %0, %arg1 : i32
    %c0_i32 = arith.constant 0 : i32
    %c0_i32_0 = arith.constant 0 : i32
    return %1, %c0_i32 : i32, i32
  }
  func.func @transform_3(%arg0: i32, %arg1: i32) -> (i32, i32) {
    %c0_i32 = arith.constant 0 : i32
    %c0_i32_0 = arith.constant 0 : i32
    return %arg0, %c0_i32 : i32, i32
  }
}

</mosaic_0001>

<llo_original>
// kernel: tpu_custom_call.1
$region0: #{tpu_custom_call.1}
  #allocation0 [shape = 'u32[]', space=smem, size = 0x4, offset = 0x4, fixed_abs, tag = 'smem constant byte address 0x4 - core index']
  #allocation1 [shape = 'u32[144,128]{1,0:T(1,128)}', space=vmem, size = 0x12000, scoped, tag = 'internal scratch']
  %s0 = inlined_call_operand.hbm [shape: f32[16,128], index: 0, kind: input, shape index: {}]
  %s1 = inlined_call_operand.hbm [shape: f32[16,128], index: 1, kind: input, shape index: {}]
  %s2 = inlined_call_operand.hbm [shape: f32[16,128], index: 2, kind: input, shape index: {}]
  %s3 = inlined_call_operand.hbm [shape: f32[8,128], index: 3, kind: output, shape index: {}]
  %s4 = sld [smem:[#allocation0]]
  $region45: #{tpu_custom_call.1} parent=0
    _
  %s6 = ssub.s32 1, %s4
  %s7 = scalar_select 0, %s6, %s4
  $region1: #{tpu_custom_call.1} parent=0
    #allocation2 [shape = 'u8[8192]{0}', space=vmem, size = 0x2000, scoped, tag = 'input window, operand 0, single buffered']
    #allocation3 [shape = 's32[1]{0}', space=sflag, size = 0x4, scoped, tag = 'scoped memory for tpu_custom_call.1']
    #allocation4 [shape = 's32[1]{0}', space=sflag, size = 0x4, scoped, tag = 'scoped memory for tpu_custom_call.1']
    #allocation5 [shape = 'u8[8192]{0}', space=vmem, size = 0x2000, scoped, tag = 'input window, operand 1, single buffered']
    #allocation6 [shape = 's32[1]{0}', space=sflag, size = 0x4, scoped, tag = 'scoped memory for tpu_custom_call.1']
    #allocation7 [shape = 'u8[8192]{0}', space=vmem, size = 0x2000, scoped, tag = 'input window, operand 2, single buffered']
    #allocation8 [shape = 'u8[4096]{0}', space=vmem, size = 0x1000, scoped, tag = 'output window, operand 0, single buffered']
    %8 = vsyncpa [#allocation3], 0
    %9 = vsyncpa [#allocation6], 0
    %10 = vsyncpa [#allocation4], 0
    // Predicated region
    $region2: #{tpu_custom_call.1} parent=1 // pred_check
      _
    $region3: #{tpu_custom_call.1} parent=1 // pred_check_branch
      %12 = sbr.rel (0) target = $region5
    $region4: #{tpu_custom_call.1} parent=1 // pred_region
      %s13 = sadd.s32 0, 0
      %s14 = smul.u32 2, %s13
      %s16 = ssub.s32 256, 256
      %17 = vsyncadd [#allocation3], %s16
      %s18 = smul.addr %s14, 128
      %s19 = scalar_lea.hbm %s0, %s18
      %s20 = sshll.u32 [#allocation2], 4
      %s21 = int_to_ptr.vmem [resolvable:$true] %s20
      %26 = dma.hbm_to_vmem [thread:$0]  %s19, 256, %s21, [#allocation3], 128, 128, 8
    $region5: #{tpu_custom_call.1} parent=1 // pred_fallthru
      _
    // Predicated region
    $region6: #{tpu_custom_call.1} parent=1 // pred_check
      _
    $region7: #{tpu_custom_call.1} parent=1 // pred_check_branch
      %28 = sbr.rel (0) target = $region9
    $region8: #{tpu_custom_call.1} parent=1 // pred_region
      %s29 = sadd.s32 0, 0
      %s30 = smul.u32 2, %s29
      %s32 = ssub.s32 256, 256
      %33 = vsyncadd [#allocation6], %s32
      %s34 = smul.addr %s30, 128
      %s35 = scalar_lea.hbm %s1, %s34
      %s36 = sshll.u32 [#allocation5], 4
      %s37 = int_to_ptr.vmem [resolvable:$true] %s36
      %42 = dma.hbm_to_vmem [thread:$0]  %s35, 256, %s37, [#allocation6], 128, 128, 8
    $region9: #{tpu_custom_call.1} parent=1 // pred_fallthru
      _
    // Predicated region
    $region10: #{tpu_custom_call.1} parent=1 // pred_check
      _
    $region11: #{tpu_custom_call.1} parent=1 // pred_check_branch
      %44 = sbr.rel (0) target = $region13
    $region12: #{tpu_custom_call.1} parent=1 // pred_region
      %s45 = sadd.s32 0, 0
      %s46 = smul.u32 2, %s45
      %s48 = ssub.s32 256, 256
      %49 = vsyncadd [#allocation6], %s48
      %s50 = smul.addr %s46, 128
      %s51 = scalar_lea.hbm %s2, %s50
      %s52 = sshll.u32 [#allocation7], 4
      %s53 = int_to_ptr.vmem [resolvable:$true] %s52
      %58 = dma.hbm_to_vmem [thread:$0]  %s51, 256, %s53, [#allocation6], 128, 128, 8
    $region13: #{tpu_custom_call.1} parent=1 // pred_fallthru
      _
    // Predicated region
    $region14: #{tpu_custom_call.1} parent=1 // pred_check
      _
    $region15: #{tpu_custom_call.1} parent=1 // pred_check_branch
      %60 = sbr.rel (0) target = $region17
    $region16: #{tpu_custom_call.1} parent=1 // pred_region
      %61 = dma.done [#allocation3], 256
    $region17: #{tpu_custom_call.1} parent=1 // pred_fallthru
      _
    // Predicated region
    $region18: #{tpu_custom_call.1} parent=1 // pred_check
      _
    $region19: #{tpu_custom_call.1} parent=1 // pred_check_branch
      %63 = sbr.rel (0) target = $region21
    $region20: #{tpu_custom_call.1} parent=1 // pred_region
      %64 = dma.done [#allocation6], 256
    $region21: #{tpu_custom_call.1} parent=1 // pred_fallthru
      _
    // Predicated region
    $region22: #{tpu_custom_call.1} parent=1 // pred_check
      _
    $region23: #{tpu_custom_call.1} parent=1 // pred_check_branch
      %66 = sbr.rel (0) target = $region25
    $region24: #{tpu_custom_call.1} parent=1 // pred_region
      %67 = dma.done [#allocation6], 256
    $region25: #{tpu_custom_call.1} parent=1 // pred_fallthru
      _
    %s68 = sadd.s32 0, 0
    %s69 = smul.u32 2, %s68
    %s70 = sadd.s32 0, 0
    %s71 = smul.u32 2, %s70
    %s72 = sadd.s32 0, 0
    %s73 = smul.u32 2, %s72
    %p74 = scmp.eq.s32.totalorder 0, 0
    // Predicated region
    $region26: #{tpu_custom_call.1} parent=1 // pred_check
      %p75 = pneg %p74
    $region27: #{tpu_custom_call.1} parent=1 // pred_check_branch
      %77 = sbr.rel (%p75) target = $region29
    $region28: #{tpu_custom_call.1} parent=1 // pred_region
      %78 = vst [vmem:[#allocation8] sm:$0xff] 0.0
    $region29: #{tpu_custom_call.1} parent=1 // pred_fallthru
      _
    loop: start=0, step=1, limit=2
    $region30: #{tpu_custom_call.1} parent=1 // loop_pre_header
      _
    $region31: #{tpu_custom_call.1} parent=1 // loop_header
      %s80 = sphi 0, %s84
      %p81 = scmp.ge.s32.totalorder %s80, 2
      %v85 = vphi 0.0, %v101
    $region32: #{tpu_custom_call.1} parent=1 // loop_header_branch
      %83 = sbr.rel (%p81) target = $region36
    $region33: #{tpu_custom_call.1} parent=1 // loop_body
      %s86 = smul.u32 %s80, 8
      %s87 = scalar_lea.vmem [#allocation2], %s86
      %v88 = vld [vmem:[%s87] sm:$0xff]
      %s89 = scalar_lea.vmem [#allocation5], %s86
      %v90 = vld [vmem:[%s89] sm:$0xff]
      %s91 = scalar_lea.vmem [#allocation7], %s86
      %v92 = vld [vmem:[%s91] sm:$0xff]
      %v93 = vmax.f32 %v90, 1e-06
      %v94 = vsub.f32 %v92, %v88
      %v95 = vlog2.pop %v93
      %v96 = vmul.f32 %v95, 0.6931472
      %v97 = vmul.f32 %v94, %v94
      %v98 = vrcp.pop %v93
      %v99 = vmul.f32 %v97, %v98
      %v100 = vadd.f32 %v96, %v99
      %v101 = vadd.f32 %v85, %v100
    $region34: #{tpu_custom_call.1} parent=1 // loop_footer
      %s84 = sadd.s32 1, %s80
    $region35: #{tpu_custom_call.1} parent=1 // loop_footer_branch
      %79 = sbr.rel target = $region31
    $region36: #{tpu_custom_call.1} parent=1 // loop_exit
      _
    %v102 = vld [vmem:[#allocation8] sm:$0xff]
    %v103 = vadd.f32 %v102, %v85
    %104 = vst [vmem:[#allocation8] sm:$0xff] %v103
    // Predicated region
    $region37: #{tpu_custom_call.1} parent=1 // pred_check
      _
    $region38: #{tpu_custom_call.1} parent=1 // pred_check_branch
      %106 = sbr.rel (0) target = $region40
    $region39: #{tpu_custom_call.1} parent=1 // pred_region
      %s108 = ssub.s32 128, 128
      %109 = vsyncadd [#allocation4], %s108
      %s111 = sshll.u32 [#allocation8], 4
      %s112 = int_to_ptr.vmem [resolvable:$true] %s111
      %114 = dma.vmem_to_hbm [thread:$0]  %s112, 128, %s3, [#allocation4]
    $region40: #{tpu_custom_call.1} parent=1 // pred_fallthru
      _
    // Predicated region
    $region41: #{tpu_custom_call.1} parent=1 // pred_check
      _
    $region42: #{tpu_custom_call.1} parent=1 // pred_check_branch
      %116 = sbr.rel (0) target = $region44
    $region43: #{tpu_custom_call.1} parent=1 // pred_region
      %117 = dma.done [#allocation4], 128
    $region44: #{tpu_custom_call.1} parent=1 // pred_fallthru
      _
    %118 = vsyncpa [#allocation3], 1
    %119 = vsyncpa [#allocation6], 1
    %120 = vsyncpa [#allocation4], 1

</llo_original>
